<compile_context>
chip_gen: v7x
topology: tpu7x:2x2x1
jax: 0.10.0
libtpu: 0.0.40
codegen_flags: <defaults>
</compile_context>

<pallas_src>
import jax
import jax.numpy as jnp
from jax.experimental import pallas as pl
from jax.experimental.pallas import tpu as pltpu

# Safe on all generations: raises v5e's 16 MiB default, within v7x's 64 MiB.
VMEM_LIMIT_BYTES = 32 * 1024 * 1024


def _round_up(x, m):
    return ((x + m - 1) // m) * m


def _fit_tile(total, target):
    """Largest power-of-two-shrunk tile <= target that divides `total`."""
    t = min(target, total)
    while total % t:
        t //= 2
    return max(t, 1)


# ----------------------------------------------------------------------------
# Kernel 1: core — im2col'd 3x3 conv as a tiled matmul fused with bias + ELU.
#   patches : [M, K]   bf16   (M = B*H*W, K = C_in*9), tiled over M
#   w       : [K, Cp]  bf16   (Cp = c_core padded to 128 lanes), VMEM-resident
#   b       : [1, Cp]  f32
#   out     : [M, Cp]  bf16   (lane-dense stores; padded channels are exact 0)
# ----------------------------------------------------------------------------
def _core_kernel(p_ref, w_ref, b_ref, out_ref):
    acc = jnp.dot(p_ref[...], w_ref[...], preferred_element_type=jnp.float32)
    acc = acc + b_ref[...]
    # ELU(alpha=1): x if x > 0 else exp(x) - 1   (f32 epilogue, cast on store)
    elu = jnp.where(acc > 0, acc, jnp.exp(jnp.minimum(acc, 0.0)) - 1.0)
    out_ref[...] = elu.astype(out_ref.dtype)


def core_conv_elu(patches, w, b, *, tm=256):
    M, K = patches.shape
    _, Cp = w.shape
    tm = _fit_tile(M, tm)
    return pl.pallas_call(
        _core_kernel,
        out_shape=jax.ShapeDtypeStruct((M, Cp), jnp.bfloat16),
        grid=(pl.cdiv(M, tm),),
        in_specs=[
            pl.BlockSpec((tm, K), lambda i: (i, 0)),   # streamed patch rows
            pl.BlockSpec((K, Cp), lambda i: (0, 0)),   # weights stay resident
            pl.BlockSpec((1, Cp), lambda i: (0, 0)),
        ],
        out_specs=pl.BlockSpec((tm, Cp), lambda i: (i, 0)),
        compiler_params=pltpu.CompilerParams(
            dimension_semantics=("parallel",),         # shards across v7x's 2 TCs
            vmem_limit_bytes=VMEM_LIMIT_BYTES,
        ),
    )(patches, w, b)


# ----------------------------------------------------------------------------
# Kernel 2: readout matmul (streamed over F) fused with the Encoder_2 head:
#   out = final_scale * softplus(feat @ W + b) + final_bias
#   grid = (N_pad//tn, F_pad//tf); reduction axis (F) is last + "arbitrary",
#   output axis (N) is "parallel"; VMEM f32 accumulator with pl.when phases.
# ----------------------------------------------------------------------------
def _readout_head_kernel(feat_ref, w_ref, b_ref, scale_ref, fbias_ref,
                         out_ref, acc_ref):
    k = pl.program_id(1)

    @pl.when(k == 0)
    def _():
        acc_ref[...] = jnp.zeros_like(acc_ref)

    acc_ref[...] += jnp.dot(feat_ref[...], w_ref[...],
                            preferred_element_type=jnp.float32)

    @pl.when(k == pl.num_programs(1) - 1)
    def _():
        z = acc_ref[...] + b_ref[...]
        # numerically-stable softplus: max(z,0) + log1p(exp(-|z|))
        sp = jnp.maximum(z, 0.0) + jnp.log1p(jnp.exp(-jnp.abs(z)))
        out_ref[...] = (scale_ref[...] * sp + fbias_ref[...]).astype(out_ref.dtype)


def readout_head(feat, w, b, final_scale, final_bias, *, tf=2048, tn=128):
    B, F = feat.shape
    _, Np = w.shape
    tf = _fit_tile(F, tf)
    tn = _fit_tile(Np, tn)
    flops = 2 * B * F * Np + 6 * B * Np
    bytes_accessed = (feat.size * feat.dtype.itemsize
                      + w.size * w.dtype.itemsize
                      + 3 * Np * 4 + B * Np * 4)
    return pl.pallas_call(
        _readout_head_kernel,
        out_shape=jax.ShapeDtypeStruct((B, Np), jnp.float32),
        grid_spec=pltpu.PrefetchScalarGridSpec(
            num_scalar_prefetch=0,
            grid=(Np // tn, F // tf),                 # reduction axis last
            in_specs=[
                pl.BlockSpec((B, tf), lambda j, k: (0, k)),   # feat chunk
                pl.BlockSpec((tf, tn), lambda j, k: (k, j)),  # streamed weights
                pl.BlockSpec((1, tn), lambda j, k: (0, j)),
                pl.BlockSpec((1, tn), lambda j, k: (0, j)),
                pl.BlockSpec((1, tn), lambda j, k: (0, j)),
            ],
            out_specs=pl.BlockSpec((B, tn), lambda j, k: (0, j)),
            scratch_shapes=[pltpu.VMEM((B, tn), jnp.float32)],
        ),
        compiler_params=pltpu.CompilerParams(
            dimension_semantics=("parallel", "arbitrary"),
            vmem_limit_bytes=VMEM_LIMIT_BYTES,
        ),
        cost_estimate=pl.CostEstimate(flops=flops, transcendentals=B * Np,
                                      bytes_accessed=bytes_accessed),
    )(feat, w, b, final_scale, final_bias)


# ----------------------------------------------------------------------------
# Glue (plain JAX): im2col, parameter init, one-time kernel-layout prep.
# ----------------------------------------------------------------------------
def im2col_3x3_same(x_nchw):
    """[B, C, H, W] -> [B*H*W, C*9] patches for a 3x3 'same' conv."""
    B, C, H, W = x_nchw.shape
    xp = jnp.pad(x_nchw, ((0, 0), (0, 0), (1, 1), (1, 1)))
    slices = [xp[:, :, dh:dh + H, dw:dw + W] for dh in range(3) for dw in range(3)]
    p = jnp.stack(slices, axis=2)                      # [B, C, 9, H, W]
    p = p.transpose(0, 3, 4, 1, 2)                     # [B, H, W, C, 9]
    return p.reshape(B * H * W, C * 9)


def init_params(key, c_in, c_core, H, W, n_neurons):
    """PyTorch-layout parameters for the synthetic core/readout stack."""
    k1, k2, k3, k4 = jax.random.split(key, 4)
    conv_w = 0.1 * jax.random.normal(k1, (c_core, c_in, 3, 3), jnp.float32)
    conv_b = 0.01 * jax.random.normal(k2, (c_core,), jnp.float32)
    feat_dim = c_core * H * W                           # torch flatten: c*(H*W)+hw
    read_w = 0.02 * jax.random.normal(k3, (feat_dim, n_neurons), jnp.float32)
    read_b = 0.01 * jax.random.normal(k4, (n_neurons,), jnp.float32)
    final_scale = jnp.ones((1, n_neurons), jnp.float32)   # nn.Parameter(torch.ones)
    final_bias = jnp.zeros((1, n_neurons), jnp.float32)   # nn.Parameter(torch.zeros)
    return dict(conv_w=conv_w, conv_b=conv_b, read_w=read_w, read_b=read_b,
                final_scale=final_scale, final_bias=final_bias)


def prepare_kernel_params(p, c_in, c_core, H, W, n_neurons):
    """One-time conversion to kernel layouts: lane-pad channels/neurons, cast
    streamed weights to bf16, and fold the (channel, spatial)->(spatial, channel)
    feature permutation into the readout weight (no runtime transpose)."""
    c_pad = _round_up(c_core, 128)
    n_pad = _round_up(n_neurons, 128)

    # core conv: [c_core, C_in, 3, 3] -> [C_in*9, c_pad]  (rows = c*9 + kh*3 + kw)
    conv_w_mat = p["conv_w"].transpose(1, 2, 3, 0).reshape(c_in * 9, c_core)
    conv_w_mat = jnp.pad(conv_w_mat, ((0, 0), (0, c_pad - c_core))).astype(jnp.bfloat16)
    conv_b = jnp.pad(p["conv_b"], (0, c_pad - c_core)).reshape(1, c_pad)

    # readout: torch rows ordered c*(H*W)+hw  ->  kernel rows (hw)*c_pad + c
    w_t = p["read_w"].reshape(c_core, H * W, n_neurons)
    w_k = jnp.transpose(w_t, (1, 0, 2))                                  # [hw, c, n]
    w_k = jnp.pad(w_k, ((0, 0), (0, c_pad - c_core), (0, n_pad - n_neurons)))
    read_w = w_k.reshape(H * W * c_pad, n_pad).astype(jnp.bfloat16)

    read_b = jnp.pad(p["read_b"], (0, n_pad - n_neurons)).reshape(1, n_pad)
    final_scale = jnp.pad(p["final_scale"], ((0, 0), (0, n_pad - n_neurons)))
    final_bias = jnp.pad(p["final_bias"], ((0, 0), (0, n_pad - n_neurons)))

    return dict(conv_w_mat=conv_w_mat, conv_b=conv_b, read_w=read_w,
                read_b=read_b, final_scale=final_scale, final_bias=final_bias,
                c_pad=c_pad, n_pad=n_pad, n_neurons=n_neurons)


def encoder2_forward(kparams, x_nchw, data_key=None, repeat_channel_dim=None,
                     output_attn_weights=False):
    if repeat_channel_dim is not None:
        # torch: x = x.repeat(1, r, 1, 1); x[:, 1:, ...] = 0
        # -> only channel 0 survives; implement as zero-channel padding (no
        #    tile-then-zero HBM round trip).
        B0, C0, _, _ = x_nchw.shape
        x_nchw = jnp.pad(x_nchw[:, :1],
                         ((0, 0), (0, C0 * repeat_channel_dim - 1), (0, 0), (0, 0)))

    B, C, H, W = x_nchw.shape
    c_pad = kparams["c_pad"]

    # --- core: 3x3 conv (im2col + tiled Pallas matmul) fused with ELU ---
    patches = im2col_3x3_same(x_nchw.astype(jnp.bfloat16))        # [B*H*W, C*9] bf16
    core_out = core_conv_elu(patches, kparams["conv_w_mat"],
                             kparams["conv_b"])                    # [B*H*W, c_pad] bf16

    # feature layout is (h*W + w)*c_pad + c, which matches the readout weight's
    # row ordering (permutation folded into the static weight) -> plain reshape,
    # no runtime transpose / relayout.
    feat = core_out.reshape(B, H * W * c_pad)

    # --- readout + Encoder_2 head (fused, F-streamed Pallas kernel) ---
    out_padded = readout_head(feat, kparams["read_w"], kparams["read_b"],
                              kparams["final_scale"], kparams["final_bias"])
    out = out_padded[:, :kparams["n_neurons"]]

    # TODO(synk): output_attn_weights path (F.softplus(x) + 1, attn_weights) —
    # the synthetic linear readout produces no attention weights.
    return out


if __name__ == "__main__":
    key = jax.random.PRNGKey(0)
    kx, kp = jax.random.split(key)

    B, C, H, W = 2, 4, 16, 16
    C_CORE, N_NEURONS = 8, 32

    x = jax.random.normal(kx, (B, C, H, W), jnp.float32)
    raw_params = init_params(kp, C, C_CORE, H, W, N_NEURONS)
    kparams = prepare_kernel_params(raw_params, C, C_CORE, H, W, N_NEURONS)

    out = encoder2_forward(kparams, x)
    out = jax.block_until_ready(out)
    assert out.shape == (B, N_NEURONS) and out.dtype == jnp.float32
    assert bool(jnp.all(jnp.isfinite(out)))
    print("KERNEL_OK")
</pallas_src>

<mosaic_0001>
module attributes {stable_mosaic.version = 11 : i64} {
  func.func @_core_kernel(%arg0: i32, %arg1: memref<256x36xbf16, #tpu.memory_space<vmem>>, %arg2: memref<36x128xbf16, #tpu.memory_space<vmem>>, %arg3: memref<1x128xf32, #tpu.memory_space<vmem>>, %arg4: memref<256x128xbf16, #tpu.memory_space<vmem>>) attributes {dimension_semantics = [#tpu.dimension_semantics<parallel>], iteration_bounds = array<i64: 2>, scalar_prefetch = 0 : i64, scratch_operands = 0 : i64, tpu.core_type = #tpu.core_type<tc>, window_params = [{transform_indices = @transform_0, window_bounds = array<i64: 256, 36>}, {pipeline_mode = #tpu.pipeline_mode<synchronous>, transform_indices = @transform_1, window_bounds = array<i64: 36, 128>}, {pipeline_mode = #tpu.pipeline_mode<synchronous>, transform_indices = @transform_2, window_bounds = array<i64: 1, 128>}, {transform_indices = @transform_3, window_bounds = array<i64: 256, 128>}]} {
    %c0 = arith.constant 0 : index
    %c0_0 = arith.constant 0 : index
    %0 = vector.load %arg1[%c0, %c0_0] : memref<256x36xbf16, #tpu.memory_space<vmem>>, vector<256x36xbf16>
    %c0_1 = arith.constant 0 : index
    %c0_2 = arith.constant 0 : index
    %1 = vector.load %arg2[%c0_1, %c0_2] : memref<36x128xbf16, #tpu.memory_space<vmem>>, vector<36x128xbf16>
    %cst = arith.constant dense<0.000000e+00> : vector<256x128xf32>
    %2 = tpu.matmul %0, %1, %cst {dimension_numbers = #tpu.dot_dimension_numbers<[1], [0], [0], [1], [0, 0, 1, 1], [], []>} : vector<256x36xbf16>, vector<36x128xbf16>, vector<256x128xf32> -> vector<256x128xf32>
    %c0_3 = arith.constant 0 : index
    %c0_4 = arith.constant 0 : index
    %3 = vector.load %arg3[%c0_3, %c0_4] : memref<1x128xf32, #tpu.memory_space<vmem>>, vector<1x128xf32>
    %4 = vector.broadcast %3 : vector<1x128xf32> to vector<256x128xf32>
    %5 = arith.addf %2, %4 : vector<256x128xf32>
    %cst_5 = arith.constant 0.000000e+00 : f32
    %6 = vector.broadcast %cst_5 : f32 to vector<256x128xf32>
    %7 = arith.cmpf ogt, %5, %6 : vector<256x128xf32>
    %cst_6 = arith.constant 0.000000e+00 : f32
    %8 = vector.broadcast %cst_6 : f32 to vector<256x128xf32>
    %9 = arith.minimumf %5, %8 : vector<256x128xf32>
    %10 = math.exp %9 : vector<256x128xf32>
    %cst_7 = arith.constant 1.000000e+00 : f32
    %11 = vector.broadcast %cst_7 : f32 to vector<256x128xf32>
    %12 = arith.subf %10, %11 : vector<256x128xf32>
    %13 = arith.select %7, %5, %12 : vector<256x128xi1>, vector<256x128xf32>
    %14 = arith.truncf %13 : vector<256x128xf32> to vector<256x128xbf16>
    %c0_8 = arith.constant 0 : index
    %c0_9 = arith.constant 0 : index
    %15 = vector.load %arg4[%c0_8, %c0_9] : memref<256x128xbf16, #tpu.memory_space<vmem>>, vector<256x128xbf16>
    tpu.vector_store %arg4[%c0_8, %c0_9], %14 {strides = array<i32>} : memref<256x128xbf16, #tpu.memory_space<vmem>>, vector<256x128xbf16>,
    return
  }
  func.func @transform_0(%arg0: i32) -> (i32, i32) {
    %c0_i32 = arith.constant 0 : i32
    %c0_i32_0 = arith.constant 0 : i32
    return %arg0, %c0_i32 : i32, i32
  }
  func.func @transform_1(%arg0: i32) -> (i32, i32) {
    %c0_i32 = arith.constant 0 : i32
    %c0_i32_0 = arith.constant 0 : i32
    %c0_i32_1 = arith.constant 0 : i32
    return %c0_i32, %c0_i32_0 : i32, i32
  }
  func.func @transform_2(%arg0: i32) -> (i32, i32) {
    %c0_i32 = arith.constant 0 : i32
    %c0_i32_0 = arith.constant 0 : i32
    %c0_i32_1 = arith.constant 0 : i32
    return %c0_i32, %c0_i32_0 : i32, i32
  }
  func.func @transform_3(%arg0: i32) -> (i32, i32) {
    %c0_i32 = arith.constant 0 : i32
    %c0_i32_0 = arith.constant 0 : i32
    return %arg0, %c0_i32 : i32, i32
  }
}

</mosaic_0001>

<llo_original>
// kernel: tpu_custom_call.1
$region0: #{tpu_custom_call.1}
  #allocation0 [shape = 'u32[]', space=smem, size = 0x4, offset = 0x4, fixed_abs, tag = 'smem constant byte address 0x4 - core index']
  #allocation1 [shape = 'u32[144,128]{1,0:T(1,128)}', space=vmem, size = 0x12000, scoped, tag = 'internal scratch']
  %s0 = inlined_call_operand.vmem [shape: bf16[512,36], index: 0, kind: input, shape index: {}]
  %s1 = inlined_call_operand.vmem [shape: bf16[36,128], index: 1, kind: input, shape index: {}]
  %s2 = inlined_call_operand.vmem [shape: f32[1,128], index: 2, kind: input, shape index: {}]
  %s3 = inlined_call_operand.hbm [shape: bf16[512,128], index: 3, kind: output, shape index: {}]
  %s4 = sld [smem:[#allocation0]]
  $region45: #{tpu_custom_call.1} parent=0
    _
  %s6 = ssub.s32 1, %s4
  %s7 = scalar_select 0, %s6, %s4
  $region1: #{tpu_custom_call.1} parent=0
    #allocation2 [shape = 'u8[131072]{0}', space=vmem, size = 0x20000, scoped, tag = 'output window, operand 0']
    #allocation3 [shape = 's32[2]{0}', space=sflag, size = 0x8, scoped, tag = 'scoped memory for tpu_custom_call.1']
    %8 = vsyncpa [#allocation3], 0
    %s9 = scalar_lea.sflag [#allocation3], 1
    %10 = vsyncpa %s9, 0
    loop: start=0, step=1, limit=4
    $region2: #{tpu_custom_call.1} parent=1 // loop_pre_header
      _
    $region3: #{tpu_custom_call.1} parent=1 // loop_header
      %s12 = sphi 0, %s16
      %p13 = scmp.ge.s32.totalorder %s12, 4
      %s22 = sphi 0, %s24
      %s25 = sphi 0, %s22
      %s26 = sphi 0, %s25
      %s42 = sphi 0, %s26
      %s46 = sphi 0, %s46
      %s48 = sphi 0, %s46
      %s49 = sphi 0, %s48
      %s63 = sphi 0, %s49
      %s67 = sphi 0, %s67
      %s69 = sphi 0, %s67
      %s70 = sphi 0, %s69
      %s84 = sphi 0, %s70
      %s90 = sphi 0, %s92
      %s93 = sphi 0, %s90
      %s94 = sphi 0, %s93
      %s110 = sphi 0, %s94
    $region4: #{tpu_custom_call.1} parent=1 // loop_header_branch
      %15 = sbr.rel (%p13) target = $region8
    $region5: #{tpu_custom_call.1} parent=1 // loop_body
      %s17 = ssub.s32 %s12, 1
      %s18 = ssub.s32 %s12, 2
      %s19 = sadd.s32 %s12, 1
      %s20 = ssub.s32 %s12, %s19
      %p21 = scmp.eq.s32.totalorder %s20, 0
      %s23 = sadd.s32 %s22, 1
      %s24 = scalar_select %p21, %s22, %s23
      %p27 = pneg %p21
      %p28 = scmp.eq.s32.totalorder %s12, 1
      %p29 = por %p27, %p28
      %p30 = scmp.ne.s32.totalorder %s22, %s25
      %p31 = scmp.eq.s32.totalorder %s12, 0
      %p32 = por %p30, %p31
      %p33 = scmp.ne.s32.totalorder %s22, %s25
      %p34 = scmp.eq.s32.totalorder %s17, 1
      %p35 = por %p33, %p34
      %p36 = scmp.ne.s32.totalorder %s25, %s26
      %p37 = scmp.eq.s32.totalorder %s17, 0
      %p38 = por %p36, %p37
      %p39 = scmp.ne.s32.totalorder %s25, %s26
      %p40 = scmp.eq.s32.totalorder %s18, 1
      %p41 = por %p39, %p40
      %p43 = scmp.ne.s32.totalorder %s26, %s42
      %p44 = scmp.eq.s32.totalorder %s18, 0
      %p45 = por %p43, %p44
      %s47 = sadd.s32 %s46, 1
      %p50 = scmp.eq.s32.totalorder %s12, 1
      %p51 = scmp.ne.s32.totalorder %s46, %s48
      %p52 = scmp.eq.s32.totalorder %s12, 0
      %p53 = por %p51, %p52
      %p54 = scmp.ne.s32.totalorder %s46, %s48
      %p55 = scmp.eq.s32.totalorder %s17, 1
      %p56 = por %p54, %p55
      %p57 = scmp.ne.s32.totalorder %s48, %s49
      %p58 = scmp.eq.s32.totalorder %s17, 0
      %p59 = por %p57, %p58
      %p60 = scmp.ne.s32.totalorder %s48, %s49
      %p61 = scmp.eq.s32.totalorder %s18, 1
      %p62 = por %p60, %p61
      %p64 = scmp.ne.s32.totalorder %s49, %s63
      %p65 = scmp.eq.s32.totalorder %s18, 0
      %p66 = por %p64, %p65
      %s68 = sadd.s32 %s67, 1
      %p71 = scmp.eq.s32.totalorder %s12, 1
      %p72 = scmp.ne.s32.totalorder %s67, %s69
      %p73 = scmp.eq.s32.totalorder %s12, 0
      %p74 = por %p72, %p73
      %p75 = scmp.ne.s32.totalorder %s67, %s69
      %p76 = scmp.eq.s32.totalorder %s17, 1
      %p77 = por %p75, %p76
      %p78 = scmp.ne.s32.totalorder %s69, %s70
      %p79 = scmp.eq.s32.totalorder %s17, 0
      %p80 = por %p78, %p79
      %p81 = scmp.ne.s32.totalorder %s69, %s70
      %p82 = scmp.eq.s32.totalorder %s18, 1
      %p83 = por %p81, %p82
      %p85 = scmp.ne.s32.totalorder %s70, %s84
      %p86 = scmp.eq.s32.totalorder %s18, 0
      %p87 = por %p85, %p86
      %s88 = ssub.s32 %s12, %s19
      %p89 = scmp.eq.s32.totalorder %s88, 0
      %s91 = sadd.s32 %s90, 1
      %s92 = scalar_select %p89, %s90, %s91
      %p95 = pneg %p89
      %p96 = scmp.eq.s32.totalorder %s12, 1
      %p97 = por %p95, %p96
      %p98 = scmp.ne.s32.totalorder %s90, %s93
      %p99 = scmp.eq.s32.totalorder %s12, 0
      %p100 = por %p98, %p99
      %p101 = scmp.ne.s32.totalorder %s90, %s93
      %p102 = scmp.eq.s32.totalorder %s17, 1
      %p103 = por %p101, %p102
      %p104 = scmp.ne.s32.totalorder %s93, %s94
      %p105 = scmp.eq.s32.totalorder %s17, 0
      %p106 = por %p104, %p105
      %p107 = scmp.ne.s32.totalorder %s93, %s94
      %p108 = scmp.eq.s32.totalorder %s18, 1
      %p109 = por %p107, %p108
      %p111 = scmp.ne.s32.totalorder %s94, %s110
      %p112 = scmp.eq.s32.totalorder %s18, 0
      %p113 = por %p111, %p112
      %p114 = scmp.le.s32.totalorder 1, %s12
      %p115 = scmp.lt.s32.totalorder %s12, 3
      %p116 = pnand %p114, %p115
      %p117 = pneg %p116
      // Predicated region
      $region9: #{tpu_custom_call.1} parent=5 // pred_check
        _
      $region10: #{tpu_custom_call.1} parent=5 // pred_check_branch
        %119 = sbr.rel (%p116) target = $region12
      $region11: #{tpu_custom_call.1} parent=5 // pred_region
        %s120 = ssub.s32 %s12, 1
        // Predicated region
        $region13: #{tpu_custom_call.1} parent=11 // pred_check
          %p121 = pneg %p59
        $region14: #{tpu_custom_call.1} parent=11 // pred_check_branch
          %123 = sbr.rel (%p121) target = $region16
        $region15: #{tpu_custom_call.1} parent=11 // pred_region
          _
        $region16: #{tpu_custom_call.1} parent=11 // pred_fallthru
          _
        // Predicated region
        $region17: #{tpu_custom_call.1} parent=11 // pred_check
          %p124 = pneg %p80
        $region18: #{tpu_custom_call.1} parent=11 // pred_check_branch
          %126 = sbr.rel (%p124) target = $region20
        $region19: #{tpu_custom_call.1} parent=11 // pred_region
          _
        $region20: #{tpu_custom_call.1} parent=11 // pred_fallthru
          _
      $region12: #{tpu_custom_call.1} parent=5 // pred_fallthru
        _
      %p127 = scmp.lt.s32.totalorder %s12, 2
      // Predicated region
      $region21: #{tpu_custom_call.1} parent=5 // pred_check
        %p128 = pneg %p127
      $region22: #{tpu_custom_call.1} parent=5 // pred_check_branch
        %130 = sbr.rel (%p128) target = $region24
      $region23: #{tpu_custom_call.1} parent=5 // pred_region
        // Predicated region
        $region25: #{tpu_custom_call.1} parent=23 // pred_check
          %p131 = pneg %p32
        $region26: #{tpu_custom_call.1} parent=23 // pred_check_branch
          %133 = sbr.rel (%p131) target = $region28
        $region27: #{tpu_custom_call.1} parent=23 // pred_region
          %s134 = smul.u32 32, %s12
          %p135 = scmp.lt.s32.totalorder %s134, 63
          %s136 = scalar_select %p135, %s134, 63
          %s137 = smul.addr %s136, 4
          %s138 = scalar_lea.vmem %s0, %s137
          %s139 = smul.u32 32, %s12
        $region28: #{tpu_custom_call.1} parent=23 // pred_fallthru
          _
      $region24: #{tpu_custom_call.1} parent=5 // pred_fallthru
        _
      %p140 = scmp.le.s32.totalorder 1, %s12
      %p141 = scmp.lt.s32.totalorder %s12, 3
      %p142 = pnand %p140, %p141
      %p143 = pneg %p142
      // Predicated region
      $region29: #{tpu_custom_call.1} parent=5 // pred_check
        _
      $region30: #{tpu_custom_call.1} parent=5 // pred_check_branch
        %145 = sbr.rel (%p142) target = $region32
      $region31: #{tpu_custom_call.1} parent=5 // pred_region
        %s146 = ssub.s32 %s12, 1
        %s147 = smul.u32 32, %s17
        %p148 = scmp.lt.s32.totalorder %s147, 63
        %s149 = scalar_select %p148, %s147, 63
        %s150 = smul.addr %s149, 4
        %s151 = scalar_lea.vmem %s0, %s150
        %p152 = pneg %p38
        %p153 = pneg %p35
        %p154 = pneg %p59
        %p155 = pneg %p56
        %p156 = pneg %p80
        %p157 = pneg %p77
        %p158 = pneg %p106
        %p159 = pneg %p103
        %s160 = sand.u32 %s93, 1
        %s161 = scalar_lea.sflag [#allocation3], %s160
        %s162 = sand.u32 %s93, 1
        %s163 = smul.addr %s162, 128
        %s164 = scalar_lea.vmem [#allocation2], %s163
        %s165 = smul.u32 32, %s17
        %p166 = scmp.lt.s32.totalorder %s165, 63
        %s167 = scalar_select %p166, %s165, 63
        %s168 = smul.addr %s167, 4
        %s169 = scalar_lea.vmem %s0, %s168
        %s170 = smul.u32 32, %s17
        %s171 = smul.u32 32, %s17
        %v173 = vld [vmem:[%s169] sm:$0xf]
        %v174 = vld [vmem:[%s169 + $0x4] sm:$0xf]
        %v175 = vld [vmem:[%s169 + $0x8] sm:$0xf]
        %v176 = vld [vmem:[%s169 + $0xc] sm:$0xf]
        %v177 = vld [vmem:[%s169 + $0x10] sm:$0xf]
        %v178 = vld [vmem:[%s169 + $0x14] sm:$0xf]
        %v179 = vld [vmem:[%s169 + $0x18] sm:$0xf]
        %v180 = vld [vmem:[%s169 + $0x1c] sm:$0xf]
        %v181 = vld [vmem:[%s169 + $0x20] sm:$0xf]
        %v182 = vld [vmem:[%s169 + $0x24] sm:$0xf]
        %v183 = vld [vmem:[%s169 + $0x28] sm:$0xf]
        %v184 = vld [vmem:[%s169 + $0x2c] sm:$0xf]
        %v185 = vld [vmem:[%s169 + $0x30] sm:$0xf]
        %v186 = vld [vmem:[%s169 + $0x34] sm:$0xf]
        %v187 = vld [vmem:[%s169 + $0x38] sm:$0xf]
        %v188 = vld [vmem:[%s169 + $0x3c] sm:$0xf]
        %v189 = vld [vmem:[%s169 + $0x40] sm:$0xf]
        %v190 = vld [vmem:[%s169 + $0x44] sm:$0xf]
        %v191 = vld [vmem:[%s169 + $0x48] sm:$0xf]
        %v192 = vld [vmem:[%s169 + $0x4c] sm:$0xf]
        %v193 = vld [vmem:[%s169 + $0x50] sm:$0xf]
        %v194 = vld [vmem:[%s169 + $0x54] sm:$0xf]
        %v195 = vld [vmem:[%s169 + $0x58] sm:$0xf]
        %v196 = vld [vmem:[%s169 + $0x5c] sm:$0xf]
        %v197 = vld [vmem:[%s169 + $0x60] sm:$0xf]
        %v198 = vld [vmem:[%s169 + $0x64] sm:$0xf]
        %v199 = vld [vmem:[%s169 + $0x68] sm:$0xf]
        %v200 = vld [vmem:[%s169 + $0x6c] sm:$0xf]
        %v201 = vld [vmem:[%s169 + $0x70] sm:$0xf]
        %v202 = vld [vmem:[%s169 + $0x74] sm:$0xf]
        %v203 = vld [vmem:[%s169 + $0x78] sm:$0xf]
        %v204 = vld [vmem:[%s169 + $0x7c] sm:$0xf]
        %v205 = vld [vmem:[%s1] sm:$0xf]
        %v206 = vld [vmem:[%s1 + $0x4] sm:$0xf]
        %v207 = vld [vmem:[%s1 + $0x8] sm:$0xf]
        %v208 = vld [vmem:[%s1 + $0xc] sm:$0xf]
        %v209 = vld [vmem:[%s1 + $0x10] sm:$0x3]
        %v210 = vld [vmem:[%s2] sm:$0x1]
        %v212 = vlaneseq
        %v213 = vshrl.u32 %v212, 7
        %v214 = vsub.s32 0, %v213
        %v215 = vrot.slane %v210, %v214
        %v249 = vunpack.c.l.b16 %v173
        %v250 = vunpack.c.l.b16 %v174
        %v251 = vunpack.c.l.b16 %v175
        %v252 = vunpack.c.l.b16 %v176
        %v253 = vunpack.c.l.b16 %v177
        %v254 = vunpack.c.l.b16 %v178
        %v255 = vunpack.c.l.b16 %v179
        %v256 = vunpack.c.l.b16 %v180
        %v257 = vunpack.c.l.b16 %v181
        %v258 = vunpack.c.l.b16 %v182
        %v259 = vunpack.c.l.b16 %v183
        %v260 = vunpack.c.l.b16 %v184
        %v261 = vunpack.c.l.b16 %v185
        %v262 = vunpack.c.l.b16 %v186
        %v263 = vunpack.c.l.b16 %v187
        %v264 = vunpack.c.l.b16 %v188
        %v265 = vunpack.c.l.b16 %v189
        %v266 = vunpack.c.l.b16 %v190
        %v267 = vunpack.c.l.b16 %v191
        %v268 = vunpack.c.l.b16 %v192
        %v269 = vunpack.c.l.b16 %v193
        %v270 = vunpack.c.l.b16 %v194
        %v271 = vunpack.c.l.b16 %v195
        %v272 = vunpack.c.l.b16 %v196
        %v273 = vunpack.c.l.b16 %v197
        %v274 = vunpack.c.l.b16 %v198
        %v275 = vunpack.c.l.b16 %v199
        %v276 = vunpack.c.l.b16 %v200
        %v277 = vunpack.c.l.b16 %v201
        %v278 = vunpack.c.l.b16 %v202
        %v279 = vunpack.c.l.b16 %v203
        %v280 = vunpack.c.l.b16 %v204
        %v281 = vpack.c.b16 %v250, %v249
        %v282 = vpack.c.b16 %v252, %v251
        %v283 = vpack.c.b16 %v254, %v253
        %v284 = vpack.c.b16 %v256, %v255
        %v285 = vpack.c.b16 %v258, %v257
        %v286 = vpack.c.b16 %v260, %v259
        %v287 = vpack.c.b16 %v262, %v261
        %v288 = vpack.c.b16 %v264, %v263
        %v289 = vpack.c.b16 %v266, %v265
        %v290 = vpack.c.b16 %v268, %v267
        %v291 = vpack.c.b16 %v270, %v269
        %v292 = vpack.c.b16 %v272, %v271
        %v293 = vpack.c.b16 %v274, %v273
        %v294 = vpack.c.b16 %v276, %v275
        %v295 = vpack.c.b16 %v278, %v277
        %v296 = vpack.c.b16 %v280, %v279
        %v302 = vunpack.c.l.b16 %v205
        %v303 = vunpack.c.l.b16 %v206
        %v304 = vunpack.c.l.b16 %v207
        %v305 = vunpack.c.l.b16 %v208
        %v306 = vunpack.c.l.b16 %v209
        %v307 = vpack.c.b16 %v303, %v302
        %v308 = vpack.c.b16 %v305, %v304
        %v309 = vpack.c.b16 %v306, %v306
        %vm312 = vcmask 293888
        %v314 = vsel %vm312, %v281, 0
        %v317 = vsel %vm312, %v282, 0
        %v320 = vsel %vm312, %v283, 0
        %v323 = vsel %vm312, %v284, 0
        %v326 = vsel %vm312, %v285, 0
        %v329 = vsel %vm312, %v286, 0
        %v332 = vsel %vm312, %v287, 0
        %v335 = vsel %vm312, %v288, 0
        %v338 = vsel %vm312, %v289, 0
        %v341 = vsel %vm312, %v290, 0
        %v344 = vsel %vm312, %v291, 0
        %v347 = vsel %vm312, %v292, 0
        %v350 = vsel %vm312, %v293, 0
        %v353 = vsel %vm312, %v294, 0
        %v356 = vsel %vm312, %v295, 0
        %v359 = vsel %vm312, %v296, 0
        %vm361 = vcmask 1041408
        %v363 = vsel %vm361, %v309, 0
        %365 = vmatprep.subr.bf16.mxu0 0
        %366 = vmatpush1.bf16.msra.mxu0 %v307
        %367 = vmatprep.subr.bf16.mxu0 0
        %368 = vmatpush1.bf16.msra.mxu0 %v308
        %369 = vmatprep.subr.bf16.mxu0 0
        %370 = vmatpush1.bf16.msra.mxu0 %v363
        %371 = vmatprep.subr.bf16.mxu0 0
        %372 = vmatpush1.bf16.msra.mxu0 0
        %373 = vmatprep.subr.bf16.mxu0 0
        %374 = vmatpush1.bf16.msra.mxu0 0
        %375 = vmatprep.subr.bf16.mxu0 0
        %376 = vmatpush1.bf16.msra.mxu0 0
        %377 = vmatprep.subr.bf16.mxu0 0
        %378 = vmatpush1.bf16.msra.mxu0 0
        %379 = vmatprep.subr.bf16.mxu0 0
        %380 = vmatpush1.bf16.msra.mxu0 0
        %381 = vmatprep.subr.bf16.mxu0 0
        %382 = vmatpush1.bf16.msra.mxu0 0
        %383 = vmatprep.subr.bf16.mxu0 0
        %384 = vmatpush1.bf16.msra.mxu0 0
        %385 = vmatprep.subr.bf16.mxu0 0
        %386 = vmatpush1.bf16.msra.mxu0 0
        %387 = vmatprep.subr.bf16.mxu0 0
        %388 = vmatpush1.bf16.msra.mxu0 0
        %389 = vmatprep.subr.bf16.mxu0 0
        %390 = vmatpush1.bf16.msra.mxu0 0
        %391 = vmatprep.subr.bf16.mxu0 0
        %392 = vmatpush1.bf16.msra.mxu0 0
        %393 = vmatprep.subr.bf16.mxu0 0
        %394 = vmatpush1.bf16.msra.mxu0 0
        %395 = vmatprep.subr.bf16.mxu0 0
        %396 = vmatpush1.bf16.msra.mxu0 0
        %397 = vmatprep.mubr.bf16.mxu0 0
        %398 = vmatmul.mubr.bf16.gmra.mrb[0].mxu0 %v314
        %v399 = vpop.f32.mrb[0].mxu0
        %v400 = vadd.f32 %v215, %v399
        %v401 = vpop.f32.mrb[0].mxu0
        %v402 = vpop.f32.mrb[0].mxu0
        %v403 = vadd.f32 %v215, %v402
        %v404 = vpop.f32.mrb[0].mxu0
        %405 = vmatprep.mubr.bf16.mxu0 0
        %406 = vmatmul.mubr.bf16.gmra.mrb[0].mxu0 %v317
        %v407 = vpop.f32.mrb[0].mxu0
        %v408 = vadd.f32 %v215, %v407
        %v409 = vpop.f32.mrb[0].mxu0
        %v410 = vpop.f32.mrb[0].mxu0
        %v411 = vadd.f32 %v215, %v410
        %v412 = vpop.f32.mrb[0].mxu0
        %413 = vmatprep.mubr.bf16.mxu0 0
        %414 = vmatmul.mubr.bf16.gmra.mrb[0].mxu0 %v320
        %v415 = vpop.f32.mrb[0].mxu0
        %v416 = vadd.f32 %v215, %v415
        %v417 = vpop.f32.mrb[0].mxu0
        %v418 = vpop.f32.mrb[0].mxu0
        %v419 = vadd.f32 %v215, %v418
        %v420 = vpop.f32.mrb[0].mxu0
        %421 = vmatprep.mubr.bf16.mxu0 0
        %422 = vmatmul.mubr.bf16.gmra.mrb[0].mxu0 %v323
        %v423 = vpop.f32.mrb[0].mxu0
        %v424 = vadd.f32 %v215, %v423
        %v425 = vpop.f32.mrb[0].mxu0
        %v426 = vpop.f32.mrb[0].mxu0
        %v427 = vadd.f32 %v215, %v426
        %v428 = vpop.f32.mrb[0].mxu0
        %429 = vmatprep.mubr.bf16.mxu0 0
        %430 = vmatmul.mubr.bf16.gmra.mrb[0].mxu0 %v326
        %v431 = vpop.f32.mrb[0].mxu0
        %v432 = vadd.f32 %v215, %v431
        %v433 = vpop.f32.mrb[0].mxu0
        %v434 = vpop.f32.mrb[0].mxu0
        %v435 = vadd.f32 %v215, %v434
        %v436 = vpop.f32.mrb[0].mxu0
        %437 = vmatprep.mubr.bf16.mxu0 0
        %438 = vmatmul.mubr.bf16.gmra.mrb[0].mxu0 %v329
        %v439 = vpop.f32.mrb[0].mxu0
        %v440 = vadd.f32 %v215, %v439
        %v441 = vpop.f32.mrb[0].mxu0
        %v442 = vpop.f32.mrb[0].mxu0
        %v443 = vadd.f32 %v215, %v442
        %v444 = vpop.f32.mrb[0].mxu0
        %445 = vmatprep.mubr.bf16.mxu0 0
        %446 = vmatmul.mubr.bf16.gmra.mrb[0].mxu0 %v332
        %v447 = vpop.f32.mrb[0].mxu0
        %v448 = vadd.f32 %v215, %v447
        %v449 = vpop.f32.mrb[0].mxu0
        %v450 = vpop.f32.mrb[0].mxu0
        %v451 = vadd.f32 %v215, %v450
        %v452 = vpop.f32.mrb[0].mxu0
        %453 = vmatprep.mubr.bf16.mxu0 0
        %454 = vmatmul.mubr.bf16.gmra.mrb[0].mxu0 %v335
        %v455 = vpop.f32.mrb[0].mxu0
        %v456 = vadd.f32 %v215, %v455
        %v457 = vpop.f32.mrb[0].mxu0
        %v458 = vpop.f32.mrb[0].mxu0
        %v459 = vadd.f32 %v215, %v458
        %v460 = vpop.f32.mrb[0].mxu0
        %461 = vmatprep.mubr.bf16.mxu0 0
        %462 = vmatmul.mubr.bf16.gmra.mrb[0].mxu0 %v338
        %v463 = vpop.f32.mrb[0].mxu0
        %v464 = vadd.f32 %v215, %v463
        %v465 = vpop.f32.mrb[0].mxu0
        %v466 = vpop.f32.mrb[0].mxu0
        %v467 = vadd.f32 %v215, %v466
        %v468 = vpop.f32.mrb[0].mxu0
        %469 = vmatprep.mubr.bf16.mxu0 0
        %470 = vmatmul.mubr.bf16.gmra.mrb[0].mxu0 %v341
        %v471 = vpop.f32.mrb[0].mxu0
        %v472 = vadd.f32 %v215, %v471
        %v473 = vpop.f32.mrb[0].mxu0
        %v474 = vpop.f32.mrb[0].mxu0
        %v475 = vadd.f32 %v215, %v474
        %v476 = vpop.f32.mrb[0].mxu0
        %477 = vmatprep.mubr.bf16.mxu0 0
        %478 = vmatmul.mubr.bf16.gmra.mrb[0].mxu0 %v344
        %v479 = vpop.f32.mrb[0].mxu0
        %v480 = vadd.f32 %v215, %v479
        %v481 = vpop.f32.mrb[0].mxu0
        %v482 = vpop.f32.mrb[0].mxu0
        %v483 = vadd.f32 %v215, %v482
        %v484 = vpop.f32.mrb[0].mxu0
        %485 = vmatprep.mubr.bf16.mxu0 0
        %486 = vmatmul.mubr.bf16.gmra.mrb[0].mxu0 %v347
        %v487 = vpop.f32.mrb[0].mxu0
        %v488 = vadd.f32 %v215, %v487
        %v489 = vpop.f32.mrb[0].mxu0
        %v490 = vpop.f32.mrb[0].mxu0
        %v491 = vadd.f32 %v215, %v490
        %v492 = vpop.f32.mrb[0].mxu0
        %493 = vmatprep.mubr.bf16.mxu0 0
        %494 = vmatmul.mubr.bf16.gmra.mrb[0].mxu0 %v350
        %v495 = vpop.f32.mrb[0].mxu0
        %v496 = vadd.f32 %v215, %v495
        %v497 = vpop.f32.mrb[0].mxu0
        %v498 = vpop.f32.mrb[0].mxu0
        %v499 = vadd.f32 %v215, %v498
        %v500 = vpop.f32.mrb[0].mxu0
        %501 = vmatprep.mubr.bf16.mxu0 0
        %502 = vmatmul.mubr.bf16.gmra.mrb[0].mxu0 %v353
        %v503 = vpop.f32.mrb[0].mxu0
        %v504 = vadd.f32 %v215, %v503
        %v505 = vpop.f32.mrb[0].mxu0
        %v506 = vpop.f32.mrb[0].mxu0
        %v507 = vadd.f32 %v215, %v506
        %v508 = vpop.f32.mrb[0].mxu0
        %509 = vmatprep.mubr.bf16.mxu0 0
        %510 = vmatmul.mubr.bf16.gmra.mrb[0].mxu0 %v356
        %v511 = vpop.f32.mrb[0].mxu0
        %v512 = vadd.f32 %v215, %v511
        %v513 = vpop.f32.mrb[0].mxu0
        %v514 = vpop.f32.mrb[0].mxu0
        %v515 = vadd.f32 %v215, %v514
        %v516 = vpop.f32.mrb[0].mxu0
        %517 = vmatprep.mubr.bf16.mxu0 0
        %518 = vmatmul.mubr.bf16.gmra.mrb[0].mxu0 %v359
        %v519 = vpop.f32.mrb[0].mxu0
        %v520 = vadd.f32 %v215, %v519
        %v521 = vpop.f32.mrb[0].mxu0
        %v522 = vpop.f32.mrb[0].mxu0
        %v523 = vadd.f32 %v215, %v522
        %v524 = vpop.f32.mrb[0].mxu0
        %525 = vdwg.mxu0
        %vm526 = vcmp.gt.f32.partialorder %v400, 0.0
        %vm527 = vcmp.gt.f32.partialorder %v403, 0.0
        %vm528 = vcmp.gt.f32.partialorder %v408, 0.0
        %vm529 = vcmp.gt.f32.partialorder %v411, 0.0
        %vm530 = vcmp.gt.f32.partialorder %v416, 0.0
        %vm531 = vcmp.gt.f32.partialorder %v419, 0.0
        %vm532 = vcmp.gt.f32.partialorder %v424, 0.0
        %vm533 = vcmp.gt.f32.partialorder %v427, 0.0
        %vm534 = vcmp.gt.f32.partialorder %v432, 0.0
        %vm535 = vcmp.gt.f32.partialorder %v435, 0.0
        %vm536 = vcmp.gt.f32.partialorder %v440, 0.0
        %vm537 = vcmp.gt.f32.partialorder %v443, 0.0
        %vm538 = vcmp.gt.f32.partialorder %v448, 0.0
        %vm539 = vcmp.gt.f32.partialorder %v451, 0.0
        %vm540 = vcmp.gt.f32.partialorder %v456, 0.0
        %vm541 = vcmp.gt.f32.partialorder %v459, 0.0
        %vm542 = vcmp.gt.f32.partialorder %v464, 0.0
        %vm543 = vcmp.gt.f32.partialorder %v467, 0.0
        %vm544 = vcmp.gt.f32.partialorder %v472, 0.0
        %vm545 = vcmp.gt.f32.partialorder %v475, 0.0
        %vm546 = vcmp.gt.f32.partialorder %v480, 0.0
        %vm547 = vcmp.gt.f32.partialorder %v483, 0.0
        %vm548 = vcmp.gt.f32.partialorder %v488, 0.0
        %vm549 = vcmp.gt.f32.partialorder %v491, 0.0
        %vm550 = vcmp.gt.f32.partialorder %v496, 0.0
        %vm551 = vcmp.gt.f32.partialorder %v499, 0.0
        %vm552 = vcmp.gt.f32.partialorder %v504, 0.0
        %vm553 = vcmp.gt.f32.partialorder %v507, 0.0
        %vm554 = vcmp.gt.f32.partialorder %v512, 0.0
        %vm555 = vcmp.gt.f32.partialorder %v515, 0.0
        %vm556 = vcmp.gt.f32.partialorder %v520, 0.0
        %vm557 = vcmp.gt.f32.partialorder %v523, 0.0
        %v558 = vmin.f32 %v400, 0.0
        %v559 = vmin.f32 %v403, 0.0
        %v560 = vmin.f32 %v408, 0.0
        %v561 = vmin.f32 %v411, 0.0
        %v562 = vmin.f32 %v416, 0.0
        %v563 = vmin.f32 %v419, 0.0
        %v564 = vmin.f32 %v424, 0.0
        %v565 = vmin.f32 %v427, 0.0
        %v566 = vmin.f32 %v432, 0.0
        %v567 = vmin.f32 %v435, 0.0
        %v568 = vmin.f32 %v440, 0.0
        %v569 = vmin.f32 %v443, 0.0
        %v570 = vmin.f32 %v448, 0.0
        %v571 = vmin.f32 %v451, 0.0
        %v572 = vmin.f32 %v456, 0.0
        %v573 = vmin.f32 %v459, 0.0
        %v574 = vmin.f32 %v464, 0.0
        %v575 = vmin.f32 %v467, 0.0
        %v576 = vmin.f32 %v472, 0.0
        %v577 = vmin.f32 %v475, 0.0
        %v578 = vmin.f32 %v480, 0.0
        %v579 = vmin.f32 %v483, 0.0
        %v580 = vmin.f32 %v488, 0.0
        %v581 = vmin.f32 %v491, 0.0
        %v582 = vmin.f32 %v496, 0.0
        %v583 = vmin.f32 %v499, 0.0
        %v584 = vmin.f32 %v504, 0.0
        %v585 = vmin.f32 %v507, 0.0
        %v586 = vmin.f32 %v512, 0.0
        %v587 = vmin.f32 %v515, 0.0
        %v588 = vmin.f32 %v520, 0.0
        %v589 = vmin.f32 %v523, 0.0
        %v590 = vmul.f32 %v558, 1.442695
        %v591 = vpow.pop %v590
        %v592 = vmul.f32 %v559, 1.442695
        %v593 = vpow.pop %v592
        %v594 = vmul.f32 %v560, 1.442695
        %v595 = vpow.pop %v594
        %v596 = vmul.f32 %v561, 1.442695
        %v597 = vpow.pop %v596
        %v598 = vmul.f32 %v562, 1.442695
        %v599 = vpow.pop %v598
        %v600 = vmul.f32 %v563, 1.442695
        %v601 = vpow.pop %v600
        %v602 = vmul.f32 %v564, 1.442695
        %v603 = vpow.pop %v602
        %v604 = vmul.f32 %v565, 1.442695
        %v605 = vpow.pop %v604
        %v606 = vmul.f32 %v566, 1.442695
        %v607 = vpow.pop %v606
        %v608 = vmul.f32 %v567, 1.442695
        %v609 = vpow.pop %v608
        %v610 = vmul.f32 %v568, 1.442695
        %v611 = vpow.pop %v610
        %v612 = vmul.f32 %v569, 1.442695
        %v613 = vpow.pop %v612
        %v614 = vmul.f32 %v570, 1.442695
        %v615 = vpow.pop %v614
        %v616 = vmul.f32 %v571, 1.442695
        %v617 = vpow.pop %v616
        %v618 = vmul.f32 %v572, 1.442695
        %v619 = vpow.pop %v618
        %v620 = vmul.f32 %v573, 1.442695
        %v621 = vpow.pop %v620
        %v622 = vmul.f32 %v574, 1.442695
        %v623 = vpow.pop %v622
        %v624 = vmul.f32 %v575, 1.442695
        %v625 = vpow.pop %v624
        %v626 = vmul.f32 %v576, 1.442695
        %v627 = vpow.pop %v626
        %v628 = vmul.f32 %v577, 1.442695
        %v629 = vpow.pop %v628
        %v630 = vmul.f32 %v578, 1.442695
        %v631 = vpow.pop %v630
        %v632 = vmul.f32 %v579, 1.442695
        %v633 = vpow.pop %v632
        %v634 = vmul.f32 %v580, 1.442695
        %v635 = vpow.pop %v634
        %v636 = vmul.f32 %v581, 1.442695
        %v637 = vpow.pop %v636
        %v638 = vmul.f32 %v582, 1.442695
        %v639 = vpow.pop %v638
        %v640 = vmul.f32 %v583, 1.442695
        %v641 = vpow.pop %v640
        %v642 = vmul.f32 %v584, 1.442695
        %v643 = vpow.pop %v642
        %v644 = vmul.f32 %v585, 1.442695
        %v645 = vpow.pop %v644
        %v646 = vmul.f32 %v586, 1.442695
        %v647 = vpow.pop %v646
        %v648 = vmul.f32 %v587, 1.442695
        %v649 = vpow.pop %v648
        %v650 = vmul.f32 %v588, 1.442695
        %v651 = vpow.pop %v650
        %v652 = vmul.f32 %v589, 1.442695
        %v653 = vpow.pop %v652
        %v654 = vsub.f32 %v591, 1.0
        %v655 = vsub.f32 %v593, 1.0
        %v656 = vsub.f32 %v595, 1.0
        %v657 = vsub.f32 %v597, 1.0
        %v658 = vsub.f32 %v599, 1.0
        %v659 = vsub.f32 %v601, 1.0
        %v660 = vsub.f32 %v603, 1.0
        %v661 = vsub.f32 %v605, 1.0
        %v662 = vsub.f32 %v607, 1.0
        %v663 = vsub.f32 %v609, 1.0
        %v664 = vsub.f32 %v611, 1.0
        %v665 = vsub.f32 %v613, 1.0
        %v666 = vsub.f32 %v615, 1.0
        %v667 = vsub.f32 %v617, 1.0
        %v668 = vsub.f32 %v619, 1.0
        %v669 = vsub.f32 %v621, 1.0
        %v670 = vsub.f32 %v623, 1.0
        %v671 = vsub.f32 %v625, 1.0
        %v672 = vsub.f32 %v627, 1.0
        %v673 = vsub.f32 %v629, 1.0
        %v674 = vsub.f32 %v631, 1.0
        %v675 = vsub.f32 %v633, 1.0
        %v676 = vsub.f32 %v635, 1.0
        %v677 = vsub.f32 %v637, 1.0
        %v678 = vsub.f32 %v639, 1.0
        %v679 = vsub.f32 %v641, 1.0
        %v680 = vsub.f32 %v643, 1.0
        %v681 = vsub.f32 %v645, 1.0
        %v682 = vsub.f32 %v647, 1.0
        %v683 = vsub.f32 %v649, 1.0
        %v684 = vsub.f32 %v651, 1.0
        %v685 = vsub.f32 %v653, 1.0
        %v686 = vsel %vm526, %v400, %v654
        %v687 = vsel %vm527, %v403, %v655
        %v688 = vsel %vm528, %v408, %v656
        %v689 = vsel %vm529, %v411, %v657
        %v690 = vsel %vm530, %v416, %v658
        %v691 = vsel %vm531, %v419, %v659
        %v692 = vsel %vm532, %v424, %v660
        %v693 = vsel %vm533, %v427, %v661
        %v694 = vsel %vm534, %v432, %v662
        %v695 = vsel %vm535, %v435, %v663
        %v696 = vsel %vm536, %v440, %v664
        %v697 = vsel %vm537, %v443, %v665
        %v698 = vsel %vm538, %v448, %v666
        %v699 = vsel %vm539, %v451, %v667
        %v700 = vsel %vm540, %v456, %v668
        %v701 = vsel %vm541, %v459, %v669
        %v702 = vsel %vm542, %v464, %v670
        %v703 = vsel %vm543, %v467, %v671
        %v704 = vsel %vm544, %v472, %v672
        %v705 = vsel %vm545, %v475, %v673
        %v706 = vsel %vm546, %v480, %v674
        %v707 = vsel %vm547, %v483, %v675
        %v708 = vsel %vm548, %v488, %v676
        %v709 = vsel %vm549, %v491, %v677
        %v710 = vsel %vm550, %v496, %v678
        %v711 = vsel %vm551, %v499, %v679
        %v712 = vsel %vm552, %v504, %v680
        %v713 = vsel %vm553, %v507, %v681
        %v714 = vsel %vm554, %v512, %v682
        %v715 = vsel %vm555, %v515, %v683
        %v716 = vsel %vm556, %v520, %v684
        %v717 = vsel %vm557, %v523, %v685
        %v718 = vpack.c.bf16 %v687, %v686
        %v719 = vpack.c.bf16 %v689, %v688
        %v720 = vpack.c.bf16 %v691, %v690
        %v721 = vpack.c.bf16 %v693, %v692
        %v722 = vpack.c.bf16 %v695, %v694
        %v723 = vpack.c.bf16 %v697, %v696
        %v724 = vpack.c.bf16 %v699, %v698
        %v725 = vpack.c.bf16 %v701, %v700
        %v726 = vpack.c.bf16 %v703, %v702
        %v727 = vpack.c.bf16 %v705, %v704
        %v728 = vpack.c.bf16 %v707, %v706
        %v729 = vpack.c.bf16 %v709, %v708
        %v730 = vpack.c.bf16 %v711, %v710
        %v731 = vpack.c.bf16 %v713, %v712
        %v732 = vpack.c.bf16 %v715, %v714
        %v733 = vpack.c.bf16 %v717, %v716
        %v750 = vunpack.c.l.b16 %v718
        %v751 = vunpack.c.h.b16 %v718
        %v752 = vunpack.c.l.b16 %v719
        %v753 = vunpack.c.h.b16 %v719
        %v754 = vunpack.c.l.b16 %v720
        %v755 = vunpack.c.h.b16 %v720
        %v756 = vunpack.c.l.b16 %v721
        %v757 = vunpack.c.h.b16 %v721
        %v758 = vunpack.c.l.b16 %v722
        %v759 = vunpack.c.h.b16 %v722
        %v760 = vunpack.c.l.b16 %v723
        %v761 = vunpack.c.h.b16 %v723
        %v762 = vunpack.c.l.b16 %v724
        %v763 = vunpack.c.h.b16 %v724
        %v764 = vunpack.c.l.b16 %v725
        %v765 = vunpack.c.h.b16 %v725
        %v766 = vunpack.c.l.b16 %v726
        %v767 = vunpack.c.h.b16 %v726
        %v768 = vunpack.c.l.b16 %v727
        %v769 = vunpack.c.h.b16 %v727
        %v770 = vunpack.c.l.b16 %v728
        %v771 = vunpack.c.h.b16 %v728
        %v772 = vunpack.c.l.b16 %v729
        %v773 = vunpack.c.h.b16 %v729
        %v774 = vunpack.c.l.b16 %v730
        %v775 = vunpack.c.h.b16 %v730
        %v776 = vunpack.c.l.b16 %v731
        %v777 = vunpack.c.h.b16 %v731
        %v778 = vunpack.c.l.b16 %v732
        %v779 = vunpack.c.h.b16 %v732
        %v780 = vunpack.c.l.b16 %v733
        %v781 = vunpack.c.h.b16 %v733
        %v782 = vpack.c.b16 %v750, %v750
        %v783 = vpack.c.b16 %v751, %v751
        %v784 = vpack.c.b16 %v752, %v752
        %v785 = vpack.c.b16 %v753, %v753
        %v786 = vpack.c.b16 %v754, %v754
        %v787 = vpack.c.b16 %v755, %v755
        %v788 = vpack.c.b16 %v756, %v756
        %v789 = vpack.c.b16 %v757, %v757
        %v790 = vpack.c.b16 %v758, %v758
        %v791 = vpack.c.b16 %v759, %v759
        %v792 = vpack.c.b16 %v760, %v760
        %v793 = vpack.c.b16 %v761, %v761
        %v794 = vpack.c.b16 %v762, %v762
        %v795 = vpack.c.b16 %v763, %v763
        %v796 = vpack.c.b16 %v764, %v764
        %v797 = vpack.c.b16 %v765, %v765
        %v798 = vpack.c.b16 %v766, %v766
        %v799 = vpack.c.b16 %v767, %v767
        %v800 = vpack.c.b16 %v768, %v768
        %v801 = vpack.c.b16 %v769, %v769
        %v802 = vpack.c.b16 %v770, %v770
        %v803 = vpack.c.b16 %v771, %v771
        %v804 = vpack.c.b16 %v772, %v772
        %v805 = vpack.c.b16 %v773, %v773
        %v806 = vpack.c.b16 %v774, %v774
        %v807 = vpack.c.b16 %v775, %v775
        %v808 = vpack.c.b16 %v776, %v776
        %v809 = vpack.c.b16 %v777, %v777
        %v810 = vpack.c.b16 %v778, %v778
        %v811 = vpack.c.b16 %v779, %v779
        %v812 = vpack.c.b16 %v780, %v780
        %v813 = vpack.c.b16 %v781, %v781
        %846 = vst [vmem:[%s164] sm:$0xf] %v782
        %847 = vst [vmem:[%s164 + $0x4] sm:$0xf] %v783
        %848 = vst [vmem:[%s164 + $0x8] sm:$0xf] %v784
        %849 = vst [vmem:[%s164 + $0xc] sm:$0xf] %v785
        %850 = vst [vmem:[%s164 + $0x10] sm:$0xf] %v786
        %851 = vst [vmem:[%s164 + $0x14] sm:$0xf] %v787
        %852 = vst [vmem:[%s164 + $0x18] sm:$0xf] %v788
        %853 = vst [vmem:[%s164 + $0x1c] sm:$0xf] %v789
        %854 = vst [vmem:[%s164 + $0x20] sm:$0xf] %v790
        %855 = vst [vmem:[%s164 + $0x24] sm:$0xf] %v791
        %856 = vst [vmem:[%s164 + $0x28] sm:$0xf] %v792
        %857 = vst [vmem:[%s164 + $0x2c] sm:$0xf] %v793
        %858 = vst [vmem:[%s164 + $0x30] sm:$0xf] %v794
        %859 = vst [vmem:[%s164 + $0x34] sm:$0xf] %v795
        %860 = vst [vmem:[%s164 + $0x38] sm:$0xf] %v796
        %861 = vst [vmem:[%s164 + $0x3c] sm:$0xf] %v797
        %862 = vst [vmem:[%s164 + $0x40] sm:$0xf] %v798
        %863 = vst [vmem:[%s164 + $0x44] sm:$0xf] %v799
        %864 = vst [vmem:[%s164 + $0x48] sm:$0xf] %v800
        %865 = vst [vmem:[%s164 + $0x4c] sm:$0xf] %v801
        %866 = vst [vmem:[%s164 + $0x50] sm:$0xf] %v802
        %867 = vst [vmem:[%s164 + $0x54] sm:$0xf] %v803
        %868 = vst [vmem:[%s164 + $0x58] sm:$0xf] %v804
        %869 = vst [vmem:[%s164 + $0x5c] sm:$0xf] %v805
        %870 = vst [vmem:[%s164 + $0x60] sm:$0xf] %v806
        %871 = vst [vmem:[%s164 + $0x64] sm:$0xf] %v807
        %872 = vst [vmem:[%s164 + $0x68] sm:$0xf] %v808
        %873 = vst [vmem:[%s164 + $0x6c] sm:$0xf] %v809
        %874 = vst [vmem:[%s164 + $0x70] sm:$0xf] %v810
        %875 = vst [vmem:[%s164 + $0x74] sm:$0xf] %v811
        %876 = vst [vmem:[%s164 + $0x78] sm:$0xf] %v812
        %877 = vst [vmem:[%s164 + $0x7c] sm:$0xf] %v813
        %s878 = sand.u32 %s93, 1
        %s879 = scalar_lea.sflag [#allocation3], %s878
        %s880 = sand.u32 %s93, 1
        %s881 = smul.addr %s880, 128
        %s882 = scalar_lea.vmem [#allocation2], %s881
        // Predicated region
        $region33: #{tpu_custom_call.1} parent=31 // pred_check
          %p883 = pneg %p103
        $region34: #{tpu_custom_call.1} parent=31 // pred_check_branch
          %885 = sbr.rel (%p883) target = $region36
        $region35: #{tpu_custom_call.1} parent=31 // pred_region
          %s886 = smul.u32 32, %s17
          %s888 = ssub.s32 2048, 2048
          %889 = vsyncadd %s879, %s888
          %s890 = smul.addr %s886, 64
          %s891 = scalar_lea.hbm %s3, %s890
          %s892 = sshll.u32 %s882, 4
          %s893 = int_to_ptr.vmem [resolvable:$true] %s892
          %898 = dma.vmem_to_hbm [thread:$0]  %s893, 2048, %s891, %s879, 64, 64, 4
        $region36: #{tpu_custom_call.1} parent=31 // pred_fallthru
          _
      $region32: #{tpu_custom_call.1} parent=5 // pred_fallthru
        _
      %p899 = scmp.le.s32.totalorder 2, %s12
      // Predicated region
      $region37: #{tpu_custom_call.1} parent=5 // pred_check
        %p900 = pneg %p899
      $region38: #{tpu_custom_call.1} parent=5 // pred_check_branch
        %902 = sbr.rel (%p900) target = $region40
      $region39: #{tpu_custom_call.1} parent=5 // pred_region
        %s903 = ssub.s32 %s12, 2
        // Predicated region
        $region41: #{tpu_custom_call.1} parent=39 // pred_check
          %p904 = pneg %p109
        $region42: #{tpu_custom_call.1} parent=39 // pred_check_branch
          %906 = sbr.rel (%p904) target = $region44
        $region43: #{tpu_custom_call.1} parent=39 // pred_region
          %s907 = sand.u32 %s94, 1
          %s908 = scalar_lea.sflag [#allocation3], %s907
          %s909 = sand.u32 %s94, 1
          %s910 = smul.addr %s909, 128
          %s911 = scalar_lea.vmem [#allocation2], %s910
          %912 = dma.done %s908, 2048
        $region44: #{tpu_custom_call.1} parent=39 // pred_fallthru
          _
      $region40: #{tpu_custom_call.1} parent=5 // pred_fallthru
        _
    $region6: #{tpu_custom_call.1} parent=1 // loop_footer
      %s16 = sadd.s32 1, %s12
    $region7: #{tpu_custom_call.1} parent=1 // loop_footer_branch
      %11 = sbr.rel target = $region3
    $region8: #{tpu_custom_call.1} parent=1 // loop_exit
      _
    %913 = vsyncpa [#allocation3], 1
    %s914 = scalar_lea.sflag [#allocation3], 1
    %915 = vsyncpa %s914, 1

</llo_original>
